<compile_context>
chip_gen: v5e
topology: v5e:2x2
jax: 0.10.0
libtpu: 0.0.40
codegen_flags: <defaults>
</compile_context>

<pallas_src>
import jax
import jax.numpy as jnp
from jax.experimental import pallas as pl
from jax.experimental.pallas import tpu as pltpu

BN_EPS = 1e-5
_LANE = 128
_MAX_TILE = 1024  # lane tile (multiple of 128); ~85%+ of HBM roofline per guide


def _round_up(n, m):
    return ((n + m - 1) // m) * m


def _stats_kernel(w1_ref, xT_ref, sums_ref):
    """Accumulate sum(h) and sum(h*h) over the batch (lane) axis.

    w1_ref:   (4, 3)  VMEM -- linear1 weight
    xT_ref:   (3, TB) VMEM -- batch tile of x^T (batch on lanes)
    sums_ref: (4, 2)  VMEM -- resident accumulator: col 0 = sum(h), col 1 = sum(h^2)
    """
    @pl.when(pl.program_id(0) == 0)
    def _():
        sums_ref[...] = jnp.zeros_like(sums_ref)

    # h = W1 @ x as a single (4, TB) tile: 3 broadcast-FMAs.
    # (1, TB) x-row broadcast over sublanes * (4, 1) W1 column broadcast over lanes.
    h = xT_ref[0:1, :] * w1_ref[:, 0:1]
    h = h + xT_ref[1:2, :] * w1_ref[:, 1:2]
    h = h + xT_ref[2:3, :] * w1_ref[:, 2:3]

    # One pass: two independent lane reductions (sum, sumsq).
    sums_ref[:, 0:1] += jnp.sum(h, axis=1, keepdims=True)
    sums_ref[:, 1:2] += jnp.sum(h * h, axis=1, keepdims=True)


def _apply_kernel(w_ref, b_ref, xT_ref, oT_ref):
    """out^T tile = W_eff @ x^T tile + b_eff  (folded BN + linear2).

    w_ref:  (5, 3)  VMEM -- W_eff = (W2 * s) @ W1
    b_ref:  (5, 1)  VMEM -- b_eff = b2 + W2 @ (beta - s * mean)
    xT_ref: (3, TB) VMEM
    oT_ref: (5, TB) VMEM
    """
    o = xT_ref[0:1, :] * w_ref[:, 0:1]
    o = o + xT_ref[1:2, :] * w_ref[:, 1:2]
    o = o + xT_ref[2:3, :] * w_ref[:, 2:3]
    oT_ref[...] = o + b_ref[...]  # single coalesced (5, TB) lane-dense store


def nested_model_forward(x, params):
    """x: (B, 3) float32 -> (B, 5) float32 (NestedModelForTest forward)."""
    w1, b1, gamma, beta, w2, b2 = params  # shapes: (4,3),(4,),(4,),(4,),(5,4),(5,)
    del b1  # no-op under training-mode BatchNorm (centering cancels it)
    x = x.astype(jnp.float32)
    B = x.shape[0]

    tb = min(_MAX_TILE, _round_up(B, _LANE))
    b_pad = _round_up(B, tb)
    nb = b_pad // tb

    # Layout plumbing: batch on lanes, zero-padded to a multiple of the tile.
    xT = jnp.transpose(x)  # (3, B)
    if b_pad != B:
        xT = jnp.pad(xT, ((0, 0), (0, b_pad - B)))

    w1f = w1.astype(jnp.float32)

    # ---- phase 1: batch statistics of h = W1 @ x (bias-free) -----------------
    sums = pl.pallas_call(
        _stats_kernel,
        out_shape=jax.ShapeDtypeStruct((4, 2), jnp.float32),
        grid=(nb,),
        in_specs=[
            pl.BlockSpec((4, 3), lambda i: (0, 0)),
            pl.BlockSpec((3, tb), lambda i: (0, i)),
        ],
        out_specs=pl.BlockSpec((4, 2), lambda i: (0, 0)),
        compiler_params=pltpu.CompilerParams(
            dimension_semantics=("arbitrary",)),  # reduction / accumulator axis
    )(w1f, xT)

    # ---- fold: BN stats + affine + linear2 collapse to one (5,3) affine map --
    mean = sums[:, 0] / B
    var = jnp.maximum(sums[:, 1] / B - mean * mean, 0.0)  # clamp E[h^2]-E[h]^2
    s = gamma.astype(jnp.float32) * jax.lax.rsqrt(var + BN_EPS)
    w2f = w2.astype(jnp.float32)
    w_eff = (w2f * s[None, :]) @ w1f                                   # (5, 3)
    b_eff = (b2.astype(jnp.float32)
             + w2f @ (beta.astype(jnp.float32) - s * mean))[:, None]   # (5, 1)

    # ---- phase 2: apply the folded affine map tile-by-tile --------------------
    outT = pl.pallas_call(
        _apply_kernel,
        out_shape=jax.ShapeDtypeStruct((5, b_pad), jnp.float32),
        grid=(nb,),
        in_specs=[
            pl.BlockSpec((5, 3), lambda i: (0, 0)),
            pl.BlockSpec((5, 1), lambda i: (0, 0)),
            pl.BlockSpec((3, tb), lambda i: (0, i)),
        ],
        out_specs=pl.BlockSpec((5, tb), lambda i: (0, i)),
        compiler_params=pltpu.CompilerParams(
            dimension_semantics=("parallel",)),
    )(w_eff, b_eff, xT)

    return jnp.transpose(outT[:, :B])  # (B, 5)


def init_params(key):
    """PyTorch-shaped parameters with PyTorch default Linear init."""
    k1, k2, k3, k4 = jax.random.split(key, 4)
    bound1 = 1.0 / jnp.sqrt(3.0)
    w1 = jax.random.uniform(k1, (4, 3), jnp.float32, -bound1, bound1)
    b1 = jax.random.uniform(k2, (4,), jnp.float32, -bound1, bound1)
    bound2 = 1.0 / jnp.sqrt(4.0)
    w2 = jax.random.uniform(k3, (5, 4), jnp.float32, -bound2, bound2)
    b2 = jax.random.uniform(k4, (5,), jnp.float32, -bound2, bound2)
    gamma = jnp.ones((4,), jnp.float32)
    beta = jnp.zeros((4,), jnp.float32)
    return (w1, b1, gamma, beta, w2, b2)


def reference_forward(x, params):
    """Pure-JAX mirror of the PyTorch forward (training-mode BN, biased var)."""
    w1, b1, gamma, beta, w2, b2 = params
    h = x @ w1.T + b1
    mean = jnp.mean(h, axis=0, keepdims=True)
    var = jnp.mean((h - mean) ** 2, axis=0, keepdims=True)
    hn = (h - mean) / jnp.sqrt(var + BN_EPS) * gamma + beta
    return hn @ w2.T + b2


if __name__ == "__main__":
    key = jax.random.PRNGKey(0)
    kx, kp = jax.random.split(key)
    B = 8  # small batch (> 1 so BatchNorm1d training statistics are meaningful)
    x = jax.random.normal(kx, (B, 3), jnp.float32)
    params = init_params(kp)

    fwd = jax.jit(nested_model_forward)
    out = jax.block_until_ready(fwd(x, params))

    ref = reference_forward(x, params)
    assert out.shape == (B, 5), out.shape
    err = float(jnp.max(jnp.abs(out - ref)))
    assert jnp.allclose(out, ref, atol=3e-5, rtol=3e-5), err
    print("KERNEL_OK")
</pallas_src>

<mosaic_0001>
module attributes {stable_mosaic.version = 11 : i64} {
  func.func @_stats_kernel(%arg0: i32, %arg1: memref<4x3xf32, #tpu.memory_space<vmem>>, %arg2: memref<3x128xf32, #tpu.memory_space<vmem>>, %arg3: memref<4x2xf32, #tpu.memory_space<vmem>>) attributes {dimension_semantics = [#tpu.dimension_semantics<arbitrary>], iteration_bounds = array<i64: 1>, scalar_prefetch = 0 : i64, scratch_operands = 0 : i64, tpu.core_type = #tpu.core_type<tc>, window_params = [{pipeline_mode = #tpu.pipeline_mode<synchronous>, transform_indices = @transform_0, window_bounds = array<i64: 4, 3>}, {transform_indices = @transform_1, window_bounds = array<i64: 3, 128>}, {pipeline_mode = #tpu.pipeline_mode<synchronous>, transform_indices = @transform_2, window_bounds = array<i64: 4, 2>}]} {
    %c0_i32 = arith.constant 0 : i32
    %0 = arith.cmpi eq, %arg0, %c0_i32 : i32
    %1 = arith.extui %0 : i1 to i32
    %c0_i32_0 = arith.constant 0 : i32
    %2 = arith.cmpi ne, %1, %c0_i32_0 : i32
    scf.if %2 {
      %cst_19 = arith.constant 0.000000e+00 : f32
      %31 = vector.broadcast %cst_19 : f32 to vector<4x2xf32>
      %c0_20 = arith.constant 0 : index
      %c0_21 = arith.constant 0 : index
      %32 = vector.load %arg3[%c0_20, %c0_21] : memref<4x2xf32, #tpu.memory_space<vmem>>, vector<4x2xf32>
      tpu.vector_store %arg3[%c0_20, %c0_21], %31 {strides = array<i32>} : memref<4x2xf32, #tpu.memory_space<vmem>>, vector<4x2xf32>,
    } else {
    }
    %c0 = arith.constant 0 : index
    %c0_1 = arith.constant 0 : index
    %3 = vector.load %arg2[%c0, %c0_1] : memref<3x128xf32, #tpu.memory_space<vmem>>, vector<1x128xf32>
    %c0_2 = arith.constant 0 : index
    %c0_3 = arith.constant 0 : index
    %4 = vector.load %arg1[%c0_2, %c0_3] : memref<4x3xf32, #tpu.memory_space<vmem>>, vector<4x1xf32>
    %5 = vector.broadcast %3 : vector<1x128xf32> to vector<4x128xf32>
    %6 = vector.broadcast %4 : vector<4x1xf32> to vector<4x128xf32>
    %7 = arith.mulf %5, %6 : vector<4x128xf32>
    %c1 = arith.constant 1 : index
    %c0_4 = arith.constant 0 : index
    %8 = vector.load %arg2[%c1, %c0_4] : memref<3x128xf32, #tpu.memory_space<vmem>>, vector<1x128xf32>
    %c0_5 = arith.constant 0 : index
    %c1_6 = arith.constant 1 : index
    %9 = vector.load %arg1[%c0_5, %c1_6] : memref<4x3xf32, #tpu.memory_space<vmem>>, vector<4x1xf32>
    %10 = vector.broadcast %8 : vector<1x128xf32> to vector<4x128xf32>
    %11 = vector.broadcast %9 : vector<4x1xf32> to vector<4x128xf32>
    %12 = arith.mulf %10, %11 : vector<4x128xf32>
    %13 = arith.addf %7, %12 : vector<4x128xf32>
    %c2 = arith.constant 2 : index
    %c0_7 = arith.constant 0 : index
    %14 = vector.load %arg2[%c2, %c0_7] : memref<3x128xf32, #tpu.memory_space<vmem>>, vector<1x128xf32>
    %c0_8 = arith.constant 0 : index
    %c2_9 = arith.constant 2 : index
    %15 = vector.load %arg1[%c0_8, %c2_9] : memref<4x3xf32, #tpu.memory_space<vmem>>, vector<4x1xf32>
    %16 = vector.broadcast %14 : vector<1x128xf32> to vector<4x128xf32>
    %17 = vector.broadcast %15 : vector<4x1xf32> to vector<4x128xf32>
    %18 = arith.mulf %16, %17 : vector<4x128xf32>
    %19 = arith.addf %13, %18 : vector<4x128xf32>
    %c0_10 = arith.constant 0 : index
    %c0_11 = arith.constant 0 : index
    %20 = vector.load %arg3[%c0_10, %c0_11] : memref<4x2xf32, #tpu.memory_space<vmem>>, vector<4x1xf32>
    %cst = arith.constant dense<0.000000e+00> : vector<4xf32>
    %21 = vector.multi_reduction <add>, %19, %cst [1] : vector<4x128xf32> to vector<4xf32>
    %22 = vector.shape_cast %21 : vector<4xf32> to vector<4x1xf32>
    %23 = arith.addf %20, %22 : vector<4x1xf32>
    %c0_12 = arith.constant 0 : index
    %c0_13 = arith.constant 0 : index
    %24 = vector.load %arg3[%c0_12, %c0_13] : memref<4x2xf32, #tpu.memory_space<vmem>>, vector<4x1xf32>
    tpu.vector_store %arg3[%c0_12, %c0_13], %23 {strides = array<i32>} : memref<4x2xf32, #tpu.memory_space<vmem>>, vector<4x1xf32>,
    %c0_14 = arith.constant 0 : index
    %c1_15 = arith.constant 1 : index
    %25 = vector.load %arg3[%c0_14, %c1_15] : memref<4x2xf32, #tpu.memory_space<vmem>>, vector<4x1xf32>
    %26 = arith.mulf %19, %19 : vector<4x128xf32>
    %cst_16 = arith.constant dense<0.000000e+00> : vector<4xf32>
    %27 = vector.multi_reduction <add>, %26, %cst_16 [1] : vector<4x128xf32> to vector<4xf32>
    %28 = vector.shape_cast %27 : vector<4xf32> to vector<4x1xf32>
    %29 = arith.addf %25, %28 : vector<4x1xf32>
    %c0_17 = arith.constant 0 : index
    %c1_18 = arith.constant 1 : index
    %30 = vector.load %arg3[%c0_17, %c1_18] : memref<4x2xf32, #tpu.memory_space<vmem>>, vector<4x1xf32>
    tpu.vector_store %arg3[%c0_17, %c1_18], %29 {strides = array<i32>} : memref<4x2xf32, #tpu.memory_space<vmem>>, vector<4x1xf32>,
    return
  }
  func.func @transform_0(%arg0: i32) -> (i32, i32) {
    %c0_i32 = arith.constant 0 : i32
    %c0_i32_0 = arith.constant 0 : i32
    %c0_i32_1 = arith.constant 0 : i32
    return %c0_i32, %c0_i32_0 : i32, i32
  }
  func.func @transform_1(%arg0: i32) -> (i32, i32) {
    %c0_i32 = arith.constant 0 : i32
    %c0_i32_0 = arith.constant 0 : i32
    return %c0_i32, %arg0 : i32, i32
  }
  func.func @transform_2(%arg0: i32) -> (i32, i32) {
    %c0_i32 = arith.constant 0 : i32
    %c0_i32_0 = arith.constant 0 : i32
    %c0_i32_1 = arith.constant 0 : i32
    return %c0_i32, %c0_i32_0 : i32, i32
  }
}

module attributes {stable_mosaic.version = 11 : i64} {
  func.func @_apply_kernel(%arg0: i32, %arg1: memref<5x3xf32, #tpu.memory_space<vmem>>, %arg2: memref<5x1xf32, #tpu.memory_space<vmem>>, %arg3: memref<3x128xf32, #tpu.memory_space<vmem>>, %arg4: memref<5x128xf32, #tpu.memory_space<vmem>>) attributes {dimension_semantics = [#tpu.dimension_semantics<parallel>], iteration_bounds = array<i64: 1>, scalar_prefetch = 0 : i64, scratch_operands = 0 : i64, tpu.core_type = #tpu.core_type<tc>, window_params = [{pipeline_mode = #tpu.pipeline_mode<synchronous>, transform_indices = @transform_0, window_bounds = array<i64: 5, 3>}, {pipeline_mode = #tpu.pipeline_mode<synchronous>, transform_indices = @transform_1, window_bounds = array<i64: 5, 1>}, {transform_indices = @transform_2, window_bounds = array<i64: 3, 128>}, {transform_indices = @transform_3, window_bounds = array<i64: 5, 128>}]} {
    %c0 = arith.constant 0 : index
    %c0_0 = arith.constant 0 : index
    %0 = vector.load %arg3[%c0, %c0_0] : memref<3x128xf32, #tpu.memory_space<vmem>>, vector<1x128xf32>
    %c0_1 = arith.constant 0 : index
    %c0_2 = arith.constant 0 : index
    %1 = vector.load %arg1[%c0_1, %c0_2] : memref<5x3xf32, #tpu.memory_space<vmem>>, vector<5x1xf32>
    %2 = vector.broadcast %0 : vector<1x128xf32> to vector<5x128xf32>
    %3 = vector.broadcast %1 : vector<5x1xf32> to vector<5x128xf32>
    %4 = arith.mulf %2, %3 : vector<5x128xf32>
    %c1 = arith.constant 1 : index
    %c0_3 = arith.constant 0 : index
    %5 = vector.load %arg3[%c1, %c0_3] : memref<3x128xf32, #tpu.memory_space<vmem>>, vector<1x128xf32>
    %c0_4 = arith.constant 0 : index
    %c1_5 = arith.constant 1 : index
    %6 = vector.load %arg1[%c0_4, %c1_5] : memref<5x3xf32, #tpu.memory_space<vmem>>, vector<5x1xf32>
    %7 = vector.broadcast %5 : vector<1x128xf32> to vector<5x128xf32>
    %8 = vector.broadcast %6 : vector<5x1xf32> to vector<5x128xf32>
    %9 = arith.mulf %7, %8 : vector<5x128xf32>
    %10 = arith.addf %4, %9 : vector<5x128xf32>
    %c2 = arith.constant 2 : index
    %c0_6 = arith.constant 0 : index
    %11 = vector.load %arg3[%c2, %c0_6] : memref<3x128xf32, #tpu.memory_space<vmem>>, vector<1x128xf32>
    %c0_7 = arith.constant 0 : index
    %c2_8 = arith.constant 2 : index
    %12 = vector.load %arg1[%c0_7, %c2_8] : memref<5x3xf32, #tpu.memory_space<vmem>>, vector<5x1xf32>
    %13 = vector.broadcast %11 : vector<1x128xf32> to vector<5x128xf32>
    %14 = vector.broadcast %12 : vector<5x1xf32> to vector<5x128xf32>
    %15 = arith.mulf %13, %14 : vector<5x128xf32>
    %16 = arith.addf %10, %15 : vector<5x128xf32>
    %c0_9 = arith.constant 0 : index
    %c0_10 = arith.constant 0 : index
    %17 = vector.load %arg2[%c0_9, %c0_10] : memref<5x1xf32, #tpu.memory_space<vmem>>, vector<5x1xf32>
    %18 = vector.broadcast %17 : vector<5x1xf32> to vector<5x128xf32>
    %19 = arith.addf %16, %18 : vector<5x128xf32>
    %c0_11 = arith.constant 0 : index
    %c0_12 = arith.constant 0 : index
    %20 = vector.load %arg4[%c0_11, %c0_12] : memref<5x128xf32, #tpu.memory_space<vmem>>, vector<5x128xf32>
    tpu.vector_store %arg4[%c0_11, %c0_12], %19 {strides = array<i32>} : memref<5x128xf32, #tpu.memory_space<vmem>>, vector<5x128xf32>,
    return
  }
  func.func @transform_0(%arg0: i32) -> (i32, i32) {
    %c0_i32 = arith.constant 0 : i32
    %c0_i32_0 = arith.constant 0 : i32
    %c0_i32_1 = arith.constant 0 : i32
    return %c0_i32, %c0_i32_0 : i32, i32
  }
  func.func @transform_1(%arg0: i32) -> (i32, i32) {
    %c0_i32 = arith.constant 0 : i32
    %c0_i32_0 = arith.constant 0 : i32
    %c0_i32_1 = arith.constant 0 : i32
    return %c0_i32, %c0_i32_0 : i32, i32
  }
  func.func @transform_2(%arg0: i32) -> (i32, i32) {
    %c0_i32 = arith.constant 0 : i32
    %c0_i32_0 = arith.constant 0 : i32
    return %c0_i32, %arg0 : i32, i32
  }
  func.func @transform_3(%arg0: i32) -> (i32, i32) {
    %c0_i32 = arith.constant 0 : i32
    %c0_i32_0 = arith.constant 0 : i32
    return %c0_i32, %arg0 : i32, i32
  }
}

</mosaic_0001>

<llo_original>
// kernel: nested_model_forward.2
$region0: #{nested_model_forward.2}
  #allocation0 [shape = 'u32[]', space=smem, size = 0x4, offset = 0x4, fixed_abs, tag = 'smem constant byte address 0x4 - core index']
  #allocation1 [shape = 'u32[72,128]{1,0:T(1,128)}', space=vmem, size = 0x9000, scoped, tag = 'internal scratch']
  %s0 = inlined_call_operand.vmem [shape: f32[4,3], index: 0, kind: input, shape index: {}]
  %s1 = inlined_call_operand.vmem [shape: f32[3,128], index: 1, kind: input, shape index: {}]
  %s2 = inlined_call_operand.vmem [shape: f32[4,2], index: 2, kind: output, shape index: {}]
  %s3 = sld [smem:[#allocation0]]
  $region22: #{nested_model_forward.2} parent=0
    _
  %s5 = ssub.s32 1, %s3
  %s6 = scalar_select 0, %s5, %s3
  // Predicated region
  $region2: #{nested_model_forward.2} parent=0 // pred_check
    _
  $region3: #{nested_model_forward.2} parent=0 // pred_check_branch
    %8 = sbr.rel (0) target = $region5
  $region4: #{nested_model_forward.2} parent=0 // pred_region
    _
  $region5: #{nested_model_forward.2} parent=0 // pred_fallthru
    _
  // Predicated region
  $region6: #{nested_model_forward.2} parent=0 // pred_check
    _
  $region7: #{nested_model_forward.2} parent=0 // pred_check_branch
    %10 = sbr.rel (0) target = $region9
  $region8: #{nested_model_forward.2} parent=0 // pred_region
    _
  $region9: #{nested_model_forward.2} parent=0 // pred_fallthru
    _
  %p11 = scmp.eq.s32.totalorder 0, 0
  // Predicated region
  $region10: #{nested_model_forward.2} parent=0 // pred_check
    %p12 = pneg %p11
  $region11: #{nested_model_forward.2} parent=0 // pred_check_branch
    %14 = sbr.rel (%p12) target = $region13
  $region12: #{nested_model_forward.2} parent=0 // pred_region
    %vm15 = vcmask 11264
    %16 = vst.msk [vmem:[%s2] sm:$0xf] %vm15, 0.0
  $region13: #{nested_model_forward.2} parent=0 // pred_fallthru
    _
  %v17 = vld [vmem:[%s1] sm:$0x1]
  %v18 = vld [vmem:[%s0] sm:$0xf]
  %v19 = vperm.slane %v17, 0
  %21 = vset.pattern.permute.xlu0 0
  %22 = vperm.xlu0 %21, %v18
  %v23 = vpop.permute.xlu0 %22
  %v25 = vmul.f32 %v19, %v23
  %v26 = vld [vmem:[%s1 + $0x1] sm:$0x1]
  %v27 = vperm.slane %v26, 0
  %28 = vset.pattern.permute.xlu0 1
  %29 = vperm.xlu0 %28, %v18
  %v30 = vpop.permute.xlu0 %29
  %v32 = vmul.f32 %v27, %v30
  %v33 = vadd.f32 %v25, %v32
  %v34 = vld [vmem:[%s1 + $0x2] sm:$0x1]
  %v35 = vperm.slane %v34, 0
  %36 = vset.pattern.permute.xlu0 2
  %37 = vperm.xlu0 %36, %v18
  %v38 = vpop.permute.xlu0 %37
  %v40 = vmul.f32 %v35, %v38
  %v41 = vadd.f32 %v33, %v40
  %v42 = vld [vmem:[%s2] sm:$0xf]
  %vm43 = vcmask 1043456
  %v44 = vsel %vm43, %v41, 0.0
  %45 = vadd.xlane.f32.xlu0 %v44
  %v46 = vpop.xlane.xlu0 %45
  %v47 = vadd.f32 %v42, %v46
  %vm48 = vcmask 3072
  %49 = vst.msk [vmem:[%s2] sm:$0xf] %vm48, %v47
  %v50 = vld [vmem:[%s2] sm:$0xf]
  %v51 = vmul.f32 %v41, %v41
  %v52 = vsel %vm43, %v51, 0.0
  %53 = vadd.xlane.f32.xlu0 %v52
  %v54 = vpop.xlane.xlu0 %53
  %v55 = vadd.f32 %v50, %v54
  %vm56 = vcmask 11272
  %57 = vst.msk [vmem:[%s2] sm:$0xf] %vm56, %v55
  // Predicated region
  $region14: #{nested_model_forward.2} parent=0 // pred_check
    _
  $region15: #{nested_model_forward.2} parent=0 // pred_check_branch
    %59 = sbr.rel (0) target = $region17
  $region16: #{nested_model_forward.2} parent=0 // pred_region
    _
  $region17: #{nested_model_forward.2} parent=0 // pred_fallthru
    _
  // Predicated region
  $region18: #{nested_model_forward.2} parent=0 // pred_check
    _
  $region19: #{nested_model_forward.2} parent=0 // pred_check_branch
    %61 = sbr.rel (0) target = $region21
  $region20: #{nested_model_forward.2} parent=0 // pred_region
    _
  $region21: #{nested_model_forward.2} parent=0 // pred_fallthru
    _

// kernel: nested_model_forward.3
$region0: #{nested_model_forward.3}
  #allocation0 [shape = 'u32[]', space=smem, size = 0x4, offset = 0x4, fixed_abs, tag = 'smem constant byte address 0x4 - core index']
  #allocation1 [shape = 'u32[72,128]{1,0:T(1,128)}', space=vmem, size = 0x9000, scoped, tag = 'internal scratch']
  %s0 = inlined_call_operand.vmem [shape: f32[5,3], index: 0, kind: input, shape index: {}]
  %s1 = inlined_call_operand.vmem [shape: f32[5,1], index: 1, kind: input, shape index: {}]
  %s2 = inlined_call_operand.vmem [shape: f32[3,128], index: 2, kind: input, shape index: {}]
  %s3 = inlined_call_operand.vmem [shape: f32[5,128], index: 3, kind: output, shape index: {}]
  %s4 = sld [smem:[#allocation0]]
  $region22: #{nested_model_forward.3} parent=0
    _
  %s6 = ssub.s32 1, %s4
  %s7 = scalar_select 0, %s6, %s4
  // Predicated region
  $region2: #{nested_model_forward.3} parent=0 // pred_check
    _
  $region3: #{nested_model_forward.3} parent=0 // pred_check_branch
    %9 = sbr.rel (0) target = $region5
  $region4: #{nested_model_forward.3} parent=0 // pred_region
    _
  $region5: #{nested_model_forward.3} parent=0 // pred_fallthru
    _
  // Predicated region
  $region6: #{nested_model_forward.3} parent=0 // pred_check
    _
  $region7: #{nested_model_forward.3} parent=0 // pred_check_branch
    %11 = sbr.rel (0) target = $region9
  $region8: #{nested_model_forward.3} parent=0 // pred_region
    _
  $region9: #{nested_model_forward.3} parent=0 // pred_fallthru
    _
  // Predicated region
  $region10: #{nested_model_forward.3} parent=0 // pred_check
    _
  $region11: #{nested_model_forward.3} parent=0 // pred_check_branch
    %13 = sbr.rel (0) target = $region13
  $region12: #{nested_model_forward.3} parent=0 // pred_region
    _
  $region13: #{nested_model_forward.3} parent=0 // pred_fallthru
    _
  %v14 = vld [vmem:[%s2] sm:$0x1]
  %v15 = vld [vmem:[%s0] sm:$0x1f]
  %v16 = vperm.slane %v14, 0
  %18 = vset.pattern.permute.xlu0 0
  %19 = vperm.xlu0 %18, %v15
  %v20 = vpop.permute.xlu0 %19
  %v22 = vmul.f32 %v16, %v20
  %v23 = vld [vmem:[%s2 + $0x1] sm:$0x1]
  %v24 = vperm.slane %v23, 0
  %25 = vset.pattern.permute.xlu0 1
  %26 = vperm.xlu0 %25, %v15
  %v27 = vpop.permute.xlu0 %26
  %v29 = vmul.f32 %v24, %v27
  %v30 = vadd.f32 %v22, %v29
  %v31 = vld [vmem:[%s2 + $0x2] sm:$0x1]
  %v32 = vperm.slane %v31, 0
  %33 = vset.pattern.permute.xlu0 2
  %34 = vperm.xlu0 %33, %v15
  %v35 = vpop.permute.xlu0 %34
  %v37 = vmul.f32 %v32, %v35
  %v38 = vadd.f32 %v30, %v37
  %v39 = vld [vmem:[%s1] sm:$0x1f]
  %41 = vset.pattern.permute.xlu0 0
  %42 = vperm.xlu0 %41, %v39
  %v43 = vpop.permute.xlu0 %42
  %v45 = vadd.f32 %v38, %v43
  %46 = vst [vmem:[%s3] sm:$0x1f] %v45
  // Predicated region
  $region14: #{nested_model_forward.3} parent=0 // pred_check
    _
  $region15: #{nested_model_forward.3} parent=0 // pred_check_branch
    %48 = sbr.rel (0) target = $region17
  $region16: #{nested_model_forward.3} parent=0 // pred_region
    _
  $region17: #{nested_model_forward.3} parent=0 // pred_fallthru
    _
  // Predicated region
  $region18: #{nested_model_forward.3} parent=0 // pred_check
    _
  $region19: #{nested_model_forward.3} parent=0 // pred_check_branch
    %50 = sbr.rel (0) target = $region21
  $region20: #{nested_model_forward.3} parent=0 // pred_region
    _
  $region21: #{nested_model_forward.3} parent=0 // pred_fallthru
    _

</llo_original>
